<compile_context>
chip_gen: v6e
topology: v6e:2x2x1
jax: 0.10.0
libtpu: 0.0.40
codegen_flags: <defaults>
</compile_context>

<pallas_src>
import functools

import jax
import jax.numpy as jnp
from jax import lax
from jax.experimental import pallas as pl
from jax.experimental.pallas import tpu as pltpu

EPS = 1e-5


# ----------------------------- Pallas kernels ------------------------------

def _conv1x1_bn_relu_kernel(x_ref, w_ref, b_ref, o_ref):
    # o = relu(x @ w + b)   (BN scale already folded into w)
    acc = jnp.dot(x_ref[...], w_ref[...], preferred_element_type=jnp.float32)
    o_ref[...] = jnp.maximum(acc + b_ref[...], 0.0).astype(o_ref.dtype)


def _fused_block_kernel(ph_ref, xs_ref, w2_ref, b2_ref, w3_ref, b3_ref, *rest,
                        stride, rh, ho, wo, conv_shortcut):
    """Fused: grouped 3x3 conv + bn2 + relu + conv3 + bn3 + shortcut + add + relu.

    ph_ref : (1, s*s*rh, rw, Cp)  stride-phase-decomposed, spatially padded y1
    xs_ref : (1, ho, wo, Cin_p)   shortcut input (already spatially subsampled)
    w2_ref : (9*Cp, Cp)           tap-major block-diagonal grouped weight (scale folded)
    """
    if conv_shortcut:
        ws_ref, bs_ref, o_ref = rest
    else:
        (o_ref,) = rest

    s = stride
    cp = w2_ref.shape[1]
    outp = w3_ref.shape[1]

    # grouped 3x3 conv as 9 accumulated lane-dense matmuls over contiguous windows
    acc = jnp.zeros((ho * wo, cp), jnp.float32)
    for kh in range(3):
        for kw in range(3):
            tap = kh * 3 + kw
            pi = (kh % s) * s + (kw % s)      # which stride-phase
            a, b = kh // s, kw // s           # in-phase spatial offset
            win = ph_ref[0, pi * rh + a: pi * rh + a + ho, b: b + wo, :]
            acc = acc + jnp.dot(win.reshape(ho * wo, cp),
                                w2_ref[tap * cp:(tap + 1) * cp, :],
                                preferred_element_type=jnp.float32)
    y2 = jnp.maximum(acc + b2_ref[...], 0.0)

    # conv3 (1x1) + bn3
    y3 = jnp.dot(y2, w3_ref[...], preferred_element_type=jnp.float32) + b3_ref[...]

    # shortcut (fused, no HBM round trip)
    if conv_shortcut:
        xs = xs_ref[0].reshape(ho * wo, xs_ref.shape[-1])
        res = jnp.dot(xs, ws_ref[...], preferred_element_type=jnp.float32) + bs_ref[...]
    else:
        res = xs_ref[0].reshape(ho * wo, xs_ref.shape[-1])

    o_ref[0] = jnp.maximum(y3 + res, 0.0).reshape(ho, wo, outp).astype(o_ref.dtype)


# ------------------------------ Pallas wrappers -----------------------------

def conv1x1_bn_relu(x2d, w, b, *, tm_cap=1024):
    """x2d:(M,Kp) @ w:(Kp,Cp) + b, relu.  Lane-dense (Kp,Cp multiples of 128)."""
    m, k = x2d.shape
    c = w.shape[1]
    # large M tile, but keep >= 2 grid steps so both v7x TensorCores get work;
    # pad M instead of falling back to tm == M.
    tm = min(tm_cap, max(8, pl.cdiv(m, 2)))
    tm = ((tm + 7) // 8) * 8
    grid = pl.cdiv(m, tm)
    mpad = grid * tm
    if mpad != m:
        x2d = jnp.pad(x2d, ((0, mpad - m), (0, 0)))
    out = pl.pallas_call(
        _conv1x1_bn_relu_kernel,
        out_shape=jax.ShapeDtypeStruct((mpad, c), jnp.float32),
        grid_spec=pltpu.PrefetchScalarGridSpec(
            num_scalar_prefetch=0,
            grid=(grid,),
            in_specs=[
                pl.BlockSpec((tm, k), lambda i: (i, 0)),
                pl.BlockSpec((k, c), lambda i: (0, 0)),
                pl.BlockSpec((1, c), lambda i: (0, 0)),
            ],
            out_specs=pl.BlockSpec((tm, c), lambda i: (i, 0)),
        ),
        compiler_params=pltpu.CompilerParams(dimension_semantics=("parallel",)),
    )(x2d, w, b)
    return out[:m]


def fused_block_tail(phases, xs, w2m, b2, w3m, b3, wsm=None, bs=None, *,
                     stride, rh, rw, ho, wo):
    n = phases.shape[0]
    s2rh = phases.shape[1]
    cp = w2m.shape[1]
    outp = w3m.shape[1]
    cinp = xs.shape[-1]
    conv_shortcut = wsm is not None

    kernel = functools.partial(_fused_block_kernel, stride=stride, rh=rh,
                               ho=ho, wo=wo, conv_shortcut=conv_shortcut)

    in_specs = [
        pl.BlockSpec((1, s2rh, rw, cp), lambda i: (i, 0, 0, 0)),
        pl.BlockSpec((1, ho, wo, cinp), lambda i: (i, 0, 0, 0)),
        pl.BlockSpec(w2m.shape, lambda i: (0, 0)),
        pl.BlockSpec((1, cp), lambda i: (0, 0)),
        pl.BlockSpec(w3m.shape, lambda i: (0, 0)),
        pl.BlockSpec((1, outp), lambda i: (0, 0)),
    ]
    args = [phases, xs, w2m, b2, w3m, b3]
    if conv_shortcut:
        in_specs += [pl.BlockSpec(wsm.shape, lambda i: (0, 0)),
                     pl.BlockSpec((1, outp), lambda i: (0, 0))]
        args += [wsm, bs]

    return pl.pallas_call(
        kernel,
        out_shape=jax.ShapeDtypeStruct((n, ho, wo, outp), jnp.float32),
        grid_spec=pltpu.PrefetchScalarGridSpec(
            num_scalar_prefetch=0,
            grid=(n,),
            in_specs=in_specs,
            out_specs=pl.BlockSpec((1, ho, wo, outp), lambda i: (i, 0, 0, 0)),
        ),
        compiler_params=pltpu.CompilerParams(dimension_semantics=("parallel",)),
    )(*args)


# ------------------------------ Glue (plain JAX) ----------------------------

def _ceil_to(v, m):
    return ((v + m - 1) // m) * m


def fold_bn(bn):
    """Fold inference-mode BN into per-channel (scale, bias)."""
    gamma, beta, mean, var = bn
    scale = gamma / jnp.sqrt(var + EPS)
    bias = beta - mean * scale
    return scale, bias


def pad2d(a, rows, cols):
    return jnp.pad(a, ((0, rows - a.shape[0]), (0, cols - a.shape[1])))


def grouped_w2_taps(w2, hidden, group_planes):
    """(hidden, gp, 3, 3) grouped weight -> (9, Cin, Cout) block-diagonal per tap."""
    groups = hidden // group_planes
    taps = jnp.zeros((9, hidden, hidden), w2.dtype)
    for g in range(groups):
        lo, hi = g * group_planes, (g + 1) * group_planes
        blk = jnp.transpose(w2[lo:hi], (2, 3, 1, 0)).reshape(9, group_planes, group_planes)
        taps = taps.at[:, lo:hi, lo:hi].set(blk)    # taps[tap, cin, cout]
    return taps


def block_forward(x_nchw, p, *, stride, group_planes, conv_shortcut):
    """Pallas forward of the Block.  Input/output NCHW (PyTorch convention)."""
    x = jnp.transpose(x_nchw, (0, 2, 3, 1)).astype(jnp.float32)   # NHWC
    n, h, w, cin = x.shape
    hidden = p["w1"].shape[0]
    out_planes = p["w3"].shape[0]
    s = stride
    ho = (h - 1) // s + 1
    wo = (w - 1) // s + 1

    cinp = _ceil_to(cin, 128)
    hidp = _ceil_to(hidden, 128)
    outp = _ceil_to(out_planes, 128)

    # ---- conv1 (1x1) + bn1 + relu  (kernel A, lane-dense) ----
    s1, bias1 = fold_bn(p["bn1"])
    w1m = p["w1"].reshape(hidden, cin).T * s1[None, :]
    w1m = pad2d(w1m, cinp, hidp)
    b1 = pad2d(bias1[None, :], 1, hidp)
    xcp = jnp.pad(x, ((0, 0), (0, 0), (0, 0), (0, cinp - cin)))
    y1 = conv1x1_bn_relu(xcp.reshape(n * h * w, cinp), w1m, b1)
    y1 = y1.reshape(n, h, w, hidp)

    # ---- stride-phase decomposition of (pad=1) y1: cheap XLA slices, NOT 9x im2col ----
    off = 2 // s
    rh, rw = ho + off, wo + off
    ypad = jnp.pad(y1, ((0, 0), (1, s * rh - h - 1), (1, s * rw - w - 1), (0, 0)))
    phases = jnp.concatenate(
        [ypad[:, pp::s, qq::s, :] for pp in range(s) for qq in range(s)], axis=1)
    # phases: (N, s*s*rh, rw, hidp); tap (kh,kw) reads a contiguous window of one phase.

    # ---- weights for fused tail (kernel B), BN scale folded in ----
    s2, bias2 = fold_bn(p["bn2"])
    taps = grouped_w2_taps(p["w2"], hidden, group_planes) * s2[None, None, :]
    taps = jnp.pad(taps, ((0, 0), (0, hidp - hidden), (0, hidp - hidden)))
    w2m = taps.reshape(9 * hidp, hidp)
    b2 = pad2d(bias2[None, :], 1, hidp)

    s3, bias3 = fold_bn(p["bn3"])
    w3m = p["w3"].reshape(out_planes, hidden).T * s3[None, :]
    w3m = pad2d(w3m, hidp, outp)
    b3 = pad2d(bias3[None, :], 1, outp)

    if conv_shortcut:
        ss, biass = fold_bn(p["bns"])
        wsm = p["ws"].reshape(out_planes, cin).T * ss[None, :]
        wsm = pad2d(wsm, cinp, outp)
        bs = pad2d(biass[None, :], 1, outp)
        xs = xcp[:, ::s, ::s, :]                                  # (N, ho, wo, cinp)
    else:
        assert s == 1 and cin == out_planes, "identity shortcut needs stride=1, cin==out_planes"
        wsm = bs = None
        xs = jnp.pad(x, ((0, 0), (0, 0), (0, 0), (0, outp - cin)))

    out = fused_block_tail(phases, xs, w2m, b2, w3m, b3, wsm, bs,
                           stride=s, rh=rh, rw=rw, ho=ho, wo=wo)
    out = out[..., :out_planes]
    return jnp.transpose(out, (0, 3, 1, 2))                       # back to NCHW


# ----------------------- Pure-JAX reference (for checking) ------------------

def _bn_ref(y, bn):
    gamma, beta, mean, var = bn
    return (y - mean) / jnp.sqrt(var + EPS) * gamma + beta


def block_forward_ref(x_nchw, p, *, stride, group_planes, conv_shortcut):
    x = jnp.transpose(x_nchw, (0, 2, 3, 1)).astype(jnp.float32)   # NHWC
    hidden = p["w1"].shape[0]
    groups = hidden // group_planes
    dn = ("NHWC", "HWIO", "NHWC")

    w1 = jnp.transpose(p["w1"], (2, 3, 1, 0))
    y = lax.conv_general_dilated(x, w1, (1, 1), "VALID", dimension_numbers=dn)
    y = jax.nn.relu(_bn_ref(y, p["bn1"]))

    w2 = jnp.transpose(p["w2"], (2, 3, 1, 0))
    y = lax.conv_general_dilated(y, w2, (stride, stride), ((1, 1), (1, 1)),
                                 dimension_numbers=dn, feature_group_count=groups)
    y = jax.nn.relu(_bn_ref(y, p["bn2"]))

    w3 = jnp.transpose(p["w3"], (2, 3, 1, 0))
    y = lax.conv_general_dilated(y, w3, (1, 1), "VALID", dimension_numbers=dn)
    y = _bn_ref(y, p["bn3"])

    if conv_shortcut:
        ws = jnp.transpose(p["ws"], (2, 3, 1, 0))
        sc = lax.conv_general_dilated(x, ws, (stride, stride), "VALID",
                                      dimension_numbers=dn)
        sc = _bn_ref(sc, p["bns"])
    else:
        sc = x
    out = jax.nn.relu(y + sc)
    return jnp.transpose(out, (0, 3, 1, 2))


# ------------------------------- Params / main -------------------------------

def make_bn_params(key, c):
    k1, k2, k3, k4 = jax.random.split(key, 4)
    gamma = jax.random.uniform(k1, (c,), jnp.float32, 0.5, 1.5)
    beta = 0.1 * jax.random.normal(k2, (c,), jnp.float32)
    mean = 0.1 * jax.random.normal(k3, (c,), jnp.float32)
    var = jax.random.uniform(k4, (c,), jnp.float32, 0.5, 1.5)
    return (gamma, beta, mean, var)


def make_params(key, in_planes, out_planes, group_planes, conv_shortcut):
    hidden = out_planes
    keys = jax.random.split(key, 8)
    p = {
        "w1": 0.2 * jax.random.normal(keys[0], (hidden, in_planes, 1, 1), jnp.float32),
        "w2": 0.2 * jax.random.normal(keys[1], (hidden, group_planes, 3, 3), jnp.float32),
        "w3": 0.2 * jax.random.normal(keys[2], (out_planes, hidden, 1, 1), jnp.float32),
        "bn1": make_bn_params(keys[3], hidden),
        "bn2": make_bn_params(keys[4], hidden),
        "bn3": make_bn_params(keys[5], out_planes),
    }
    if conv_shortcut:
        p["ws"] = 0.2 * jax.random.normal(keys[6], (out_planes, in_planes, 1, 1), jnp.float32)
        p["bns"] = make_bn_params(keys[7], out_planes)
    return p


if __name__ == "__main__":
    key = jax.random.PRNGKey(0)

    # Config A: downsampling block with conv shortcut.
    in_planes, out_planes, stride, group_planes, conv_shortcut = 4, 8, 2, 4, True
    kx, kp = jax.random.split(key)
    x = jax.random.normal(kx, (2, in_planes, 16, 16), jnp.float32)   # NCHW
    params = make_params(kp, in_planes, out_planes, group_planes, conv_shortcut)

    out = block_forward(x, params, stride=stride, group_planes=group_planes,
                        conv_shortcut=conv_shortcut)
    out = jax.block_until_ready(out)
    ref = block_forward_ref(x, params, stride=stride, group_planes=group_planes,
                            conv_shortcut=conv_shortcut)
    assert out.shape == (2, out_planes, 8, 8), out.shape
    assert jnp.allclose(out, ref, rtol=1e-4, atol=1e-4), "mismatch (conv shortcut)"

    # Config B: identity-shortcut block (stride=1, in_planes == out_planes).
    in_planes2, out_planes2, stride2, gp2, cs2 = 8, 8, 1, 4, False
    kx2, kp2 = jax.random.split(jax.random.PRNGKey(1))
    x2 = jax.random.normal(kx2, (2, in_planes2, 16, 16), jnp.float32)
    params2 = make_params(kp2, in_planes2, out_planes2, gp2, cs2)

    out2 = block_forward(x2, params2, stride=stride2, group_planes=gp2, conv_shortcut=cs2)
    out2 = jax.block_until_ready(out2)
    ref2 = block_forward_ref(x2, params2, stride=stride2, group_planes=gp2, conv_shortcut=cs2)
    assert out2.shape == (2, out_planes2, 16, 16), out2.shape
    assert jnp.allclose(out2, ref2, rtol=1e-4, atol=1e-4), "mismatch (identity shortcut)"

    print("KERNEL_OK")
</pallas_src>

<mosaic_0001>
module attributes {stable_mosaic.version = 11 : i64} {
  func.func @_conv1x1_bn_relu_kernel(%arg0: i32, %arg1: memref<256x128xf32, #tpu.memory_space<vmem>>, %arg2: memref<128x128xf32, #tpu.memory_space<vmem>>, %arg3: memref<1x128xf32, #tpu.memory_space<vmem>>, %arg4: memref<256x128xf32, #tpu.memory_space<vmem>>) attributes {dimension_semantics = [#tpu.dimension_semantics<parallel>], iteration_bounds = array<i64: 2>, scalar_prefetch = 0 : i64, scratch_operands = 0 : i64, tpu.core_type = #tpu.core_type<tc>, window_params = [{transform_indices = @transform_0, window_bounds = array<i64: 256, 128>}, {pipeline_mode = #tpu.pipeline_mode<synchronous>, transform_indices = @transform_1, window_bounds = array<i64: 128, 128>}, {pipeline_mode = #tpu.pipeline_mode<synchronous>, transform_indices = @transform_2, window_bounds = array<i64: 1, 128>}, {transform_indices = @transform_3, window_bounds = array<i64: 256, 128>}]} {
    %c0 = arith.constant 0 : index
    %c0_0 = arith.constant 0 : index
    %0 = vector.load %arg1[%c0, %c0_0] : memref<256x128xf32, #tpu.memory_space<vmem>>, vector<256x128xf32>
    %c0_1 = arith.constant 0 : index
    %c0_2 = arith.constant 0 : index
    %1 = vector.load %arg2[%c0_1, %c0_2] : memref<128x128xf32, #tpu.memory_space<vmem>>, vector<128x128xf32>
    %cst = arith.constant dense<0.000000e+00> : vector<256x128xf32>
    %2 = tpu.matmul %0, %1, %cst {dimension_numbers = #tpu.dot_dimension_numbers<[1], [0], [0], [1], [0, 0, 1, 1], [], []>} : vector<256x128xf32>, vector<128x128xf32>, vector<256x128xf32> -> vector<256x128xf32>
    %c0_3 = arith.constant 0 : index
    %c0_4 = arith.constant 0 : index
    %3 = vector.load %arg3[%c0_3, %c0_4] : memref<1x128xf32, #tpu.memory_space<vmem>>, vector<1x128xf32>
    %4 = vector.broadcast %3 : vector<1x128xf32> to vector<256x128xf32>
    %5 = arith.addf %2, %4 : vector<256x128xf32>
    %cst_5 = arith.constant 0.000000e+00 : f32
    %6 = vector.broadcast %cst_5 : f32 to vector<256x128xf32>
    %7 = arith.maximumf %5, %6 : vector<256x128xf32>
    %c0_6 = arith.constant 0 : index
    %c0_7 = arith.constant 0 : index
    %8 = vector.load %arg4[%c0_6, %c0_7] : memref<256x128xf32, #tpu.memory_space<vmem>>, vector<256x128xf32>
    tpu.vector_store %arg4[%c0_6, %c0_7], %7 {strides = array<i32>} : memref<256x128xf32, #tpu.memory_space<vmem>>, vector<256x128xf32>,
    return
  }
  func.func @transform_0(%arg0: i32) -> (i32, i32) {
    %c0_i32 = arith.constant 0 : i32
    %c0_i32_0 = arith.constant 0 : i32
    return %arg0, %c0_i32 : i32, i32
  }
  func.func @transform_1(%arg0: i32) -> (i32, i32) {
    %c0_i32 = arith.constant 0 : i32
    %c0_i32_0 = arith.constant 0 : i32
    %c0_i32_1 = arith.constant 0 : i32
    return %c0_i32, %c0_i32_0 : i32, i32
  }
  func.func @transform_2(%arg0: i32) -> (i32, i32) {
    %c0_i32 = arith.constant 0 : i32
    %c0_i32_0 = arith.constant 0 : i32
    %c0_i32_1 = arith.constant 0 : i32
    return %c0_i32, %c0_i32_0 : i32, i32
  }
  func.func @transform_3(%arg0: i32) -> (i32, i32) {
    %c0_i32 = arith.constant 0 : i32
    %c0_i32_0 = arith.constant 0 : i32
    return %arg0, %c0_i32 : i32, i32
  }
}

</mosaic_0001>

<llo_original>
// kernel: tpu_custom_call.1
$region0: #{tpu_custom_call.1}
  #allocation0 [shape = 'u32[]', space=smem, size = 0x4, offset = 0x4, fixed_abs, tag = 'smem constant byte address 0x4 - core index']
  #allocation1 [shape = 'u32[144,128]{1,0:T(1,128)}', space=vmem, size = 0x12000, scoped, tag = 'internal scratch']
  %s0 = inlined_call_operand.hbm [shape: f32[512,128], index: 0, kind: input, shape index: {}]
  %s1 = inlined_call_operand.hbm [shape: f32[128,128], index: 1, kind: input, shape index: {}]
  %s2 = inlined_call_operand.vmem [shape: f32[1,128], index: 2, kind: input, shape index: {}]
  %s3 = inlined_call_operand.hbm [shape: f32[512,128], index: 3, kind: output, shape index: {}]
  %s4 = sld [smem:[#allocation0]]
  $region53: #{tpu_custom_call.1} parent=0
    _
  %s6 = ssub.s32 1, %s4
  %s7 = scalar_select 0, %s6, %s4
  $region1: #{tpu_custom_call.1} parent=0
    #allocation2 [shape = 'u8[262144]{0}', space=vmem, size = 0x40000, scoped, tag = 'input window, operand 0']
    #allocation3 [shape = 's32[2]{0}', space=sflag, size = 0x8, scoped, tag = 'scoped memory for tpu_custom_call.1']
    #allocation4 [shape = 's32[2]{0}', space=sflag, size = 0x8, scoped, tag = 'scoped memory for tpu_custom_call.1']
    #allocation5 [shape = 'u8[65536]{0}', space=vmem, size = 0x10000, scoped, tag = 'input window, operand 1, single buffered']
    #allocation6 [shape = 's32[1]{0}', space=sflag, size = 0x4, scoped, tag = 'scoped memory for tpu_custom_call.1']
    #allocation7 [shape = 'u8[262144]{0}', space=vmem, size = 0x40000, scoped, tag = 'output window, operand 0']
    %8 = vsyncpa [#allocation3], 0
    %s9 = scalar_lea.sflag [#allocation3], 1
    %10 = vsyncpa %s9, 0
    %11 = vsyncpa [#allocation6], 0
    %12 = vsyncpa [#allocation4], 0
    %s13 = scalar_lea.sflag [#allocation4], 1
    %14 = vsyncpa %s13, 0
    loop: start=0, step=1, limit=4
    $region2: #{tpu_custom_call.1} parent=1 // loop_pre_header
      _
    $region3: #{tpu_custom_call.1} parent=1 // loop_header
      %s16 = sphi 0, %s20
      %p17 = scmp.ge.s32.totalorder %s16, 4
      %s26 = sphi 0, %s28
      %s29 = sphi 0, %s26
      %s30 = sphi 0, %s29
      %s46 = sphi 0, %s30
      %s50 = sphi 0, %s50
      %s52 = sphi 0, %s50
      %s53 = sphi 0, %s52
      %s67 = sphi 0, %s53
      %s71 = sphi 0, %s71
      %s73 = sphi 0, %s71
      %s74 = sphi 0, %s73
      %s88 = sphi 0, %s74
      %s94 = sphi 0, %s96
      %s97 = sphi 0, %s94
      %s98 = sphi 0, %s97
      %s114 = sphi 0, %s98
    $region4: #{tpu_custom_call.1} parent=1 // loop_header_branch
      %19 = sbr.rel (%p17) target = $region8
    $region5: #{tpu_custom_call.1} parent=1 // loop_body
      %s21 = ssub.s32 %s16, 1
      %s22 = ssub.s32 %s16, 2
      %s23 = sadd.s32 %s16, 1
      %s24 = ssub.s32 %s16, %s23
      %p25 = scmp.eq.s32.totalorder %s24, 0
      %s27 = sadd.s32 %s26, 1
      %s28 = scalar_select %p25, %s26, %s27
      %p31 = pneg %p25
      %p32 = scmp.eq.s32.totalorder %s16, 1
      %p33 = por %p31, %p32
      %p34 = scmp.ne.s32.totalorder %s26, %s29
      %p35 = scmp.eq.s32.totalorder %s16, 0
      %p36 = por %p34, %p35
      %p37 = scmp.ne.s32.totalorder %s26, %s29
      %p38 = scmp.eq.s32.totalorder %s21, 1
      %p39 = por %p37, %p38
      %p40 = scmp.ne.s32.totalorder %s29, %s30
      %p41 = scmp.eq.s32.totalorder %s21, 0
      %p42 = por %p40, %p41
      %p43 = scmp.ne.s32.totalorder %s29, %s30
      %p44 = scmp.eq.s32.totalorder %s22, 1
      %p45 = por %p43, %p44
      %p47 = scmp.ne.s32.totalorder %s30, %s46
      %p48 = scmp.eq.s32.totalorder %s22, 0
      %p49 = por %p47, %p48
      %s51 = sadd.s32 %s50, 1
      %p54 = scmp.eq.s32.totalorder %s16, 1
      %p55 = scmp.ne.s32.totalorder %s50, %s52
      %p56 = scmp.eq.s32.totalorder %s16, 0
      %p57 = por %p55, %p56
      %p58 = scmp.ne.s32.totalorder %s50, %s52
      %p59 = scmp.eq.s32.totalorder %s21, 1
      %p60 = por %p58, %p59
      %p61 = scmp.ne.s32.totalorder %s52, %s53
      %p62 = scmp.eq.s32.totalorder %s21, 0
      %p63 = por %p61, %p62
      %p64 = scmp.ne.s32.totalorder %s52, %s53
      %p65 = scmp.eq.s32.totalorder %s22, 1
      %p66 = por %p64, %p65
      %p68 = scmp.ne.s32.totalorder %s53, %s67
      %p69 = scmp.eq.s32.totalorder %s22, 0
      %p70 = por %p68, %p69
      %s72 = sadd.s32 %s71, 1
      %p75 = scmp.eq.s32.totalorder %s16, 1
      %p76 = scmp.ne.s32.totalorder %s71, %s73
      %p77 = scmp.eq.s32.totalorder %s16, 0
      %p78 = por %p76, %p77
      %p79 = scmp.ne.s32.totalorder %s71, %s73
      %p80 = scmp.eq.s32.totalorder %s21, 1
      %p81 = por %p79, %p80
      %p82 = scmp.ne.s32.totalorder %s73, %s74
      %p83 = scmp.eq.s32.totalorder %s21, 0
      %p84 = por %p82, %p83
      %p85 = scmp.ne.s32.totalorder %s73, %s74
      %p86 = scmp.eq.s32.totalorder %s22, 1
      %p87 = por %p85, %p86
      %p89 = scmp.ne.s32.totalorder %s74, %s88
      %p90 = scmp.eq.s32.totalorder %s22, 0
      %p91 = por %p89, %p90
      %s92 = ssub.s32 %s16, %s23
      %p93 = scmp.eq.s32.totalorder %s92, 0
      %s95 = sadd.s32 %s94, 1
      %s96 = scalar_select %p93, %s94, %s95
      %p99 = pneg %p93
      %p100 = scmp.eq.s32.totalorder %s16, 1
      %p101 = por %p99, %p100
      %p102 = scmp.ne.s32.totalorder %s94, %s97
      %p103 = scmp.eq.s32.totalorder %s16, 0
      %p104 = por %p102, %p103
      %p105 = scmp.ne.s32.totalorder %s94, %s97
      %p106 = scmp.eq.s32.totalorder %s21, 1
      %p107 = por %p105, %p106
      %p108 = scmp.ne.s32.totalorder %s97, %s98
      %p109 = scmp.eq.s32.totalorder %s21, 0
      %p110 = por %p108, %p109
      %p111 = scmp.ne.s32.totalorder %s97, %s98
      %p112 = scmp.eq.s32.totalorder %s22, 1
      %p113 = por %p111, %p112
      %p115 = scmp.ne.s32.totalorder %s98, %s114
      %p116 = scmp.eq.s32.totalorder %s22, 0
      %p117 = por %p115, %p116
      %p118 = scmp.le.s32.totalorder 1, %s16
      %p119 = scmp.lt.s32.totalorder %s16, 3
      %p120 = pnand %p118, %p119
      %p121 = pneg %p120
      // Predicated region
      $region9: #{tpu_custom_call.1} parent=5 // pred_check
        _
      $region10: #{tpu_custom_call.1} parent=5 // pred_check_branch
        %123 = sbr.rel (%p120) target = $region12
      $region11: #{tpu_custom_call.1} parent=5 // pred_region
        %s124 = ssub.s32 %s16, 1
        // Predicated region
        $region13: #{tpu_custom_call.1} parent=11 // pred_check
          %p125 = pneg %p63
        $region14: #{tpu_custom_call.1} parent=11 // pred_check_branch
          %127 = sbr.rel (%p125) target = $region16
        $region15: #{tpu_custom_call.1} parent=11 // pred_region
          %s129 = ssub.s32 2048, 2048
          %130 = vsyncadd [#allocation6], %s129
          %s131 = sshll.u32 [#allocation5], 4
          %s132 = int_to_ptr.vmem [resolvable:$true] %s131
          %137 = dma.hbm_to_vmem [thread:$0]  %s1, 2048, %s132, [#allocation6], 128, 128, 8
        $region16: #{tpu_custom_call.1} parent=11 // pred_fallthru
          _
        // Predicated region
        $region17: #{tpu_custom_call.1} parent=11 // pred_check
          %p138 = pneg %p84
        $region18: #{tpu_custom_call.1} parent=11 // pred_check_branch
          %140 = sbr.rel (%p138) target = $region20
        $region19: #{tpu_custom_call.1} parent=11 // pred_region
          _
        $region20: #{tpu_custom_call.1} parent=11 // pred_fallthru
          _
      $region12: #{tpu_custom_call.1} parent=5 // pred_fallthru
        _
      %p141 = scmp.lt.s32.totalorder %s16, 2
      // Predicated region
      $region21: #{tpu_custom_call.1} parent=5 // pred_check
        %p142 = pneg %p141
      $region22: #{tpu_custom_call.1} parent=5 // pred_check_branch
        %144 = sbr.rel (%p142) target = $region24
      $region23: #{tpu_custom_call.1} parent=5 // pred_region
        // Predicated region
        $region25: #{tpu_custom_call.1} parent=23 // pred_check
          %p145 = pneg %p36
        $region26: #{tpu_custom_call.1} parent=23 // pred_check_branch
          %147 = sbr.rel (%p145) target = $region28
        $region27: #{tpu_custom_call.1} parent=23 // pred_region
          %s148 = sand.u32 %s26, 1
          %s149 = scalar_lea.sflag [#allocation3], %s148
          %s150 = sand.u32 %s26, 1
          %s151 = smul.addr %s150, 256
          %s152 = scalar_lea.vmem [#allocation2], %s151
          %s153 = smul.u32 32, %s16
          %s155 = ssub.s32 4096, 4096
          %156 = vsyncadd %s149, %s155
          %s157 = smul.addr %s153, 128
          %s158 = scalar_lea.hbm %s0, %s157
          %s159 = sshll.u32 %s152, 4
          %s160 = int_to_ptr.vmem [resolvable:$true] %s159
          %165 = dma.hbm_to_vmem [thread:$0]  %s158, 4096, %s160, %s149, 128, 128, 8
        $region28: #{tpu_custom_call.1} parent=23 // pred_fallthru
          _
      $region24: #{tpu_custom_call.1} parent=5 // pred_fallthru
        _
      %p166 = scmp.le.s32.totalorder 1, %s16
      %p167 = scmp.lt.s32.totalorder %s16, 3
      %p168 = pnand %p166, %p167
      %p169 = pneg %p168
      // Predicated region
      $region29: #{tpu_custom_call.1} parent=5 // pred_check
        _
      $region30: #{tpu_custom_call.1} parent=5 // pred_check_branch
        %171 = sbr.rel (%p168) target = $region32
      $region31: #{tpu_custom_call.1} parent=5 // pred_region
        %s172 = ssub.s32 %s16, 1
        %s173 = sand.u32 %s29, 1
        %s174 = scalar_lea.sflag [#allocation3], %s173
        %s175 = sand.u32 %s29, 1
        %s176 = smul.addr %s175, 256
        %s177 = scalar_lea.vmem [#allocation2], %s176
        // Predicated region
        $region33: #{tpu_custom_call.1} parent=31 // pred_check
          %p178 = pneg %p42
        $region34: #{tpu_custom_call.1} parent=31 // pred_check_branch
          %180 = sbr.rel (%p178) target = $region36
        $region35: #{tpu_custom_call.1} parent=31 // pred_region
          %181 = dma.done %s174, 4096
        $region36: #{tpu_custom_call.1} parent=31 // pred_fallthru
          _
        // Predicated region
        $region37: #{tpu_custom_call.1} parent=31 // pred_check
          %p182 = pneg %p63
        $region38: #{tpu_custom_call.1} parent=31 // pred_check_branch
          %184 = sbr.rel (%p182) target = $region40
        $region39: #{tpu_custom_call.1} parent=31 // pred_region
          %185 = dma.done [#allocation6], 2048
        $region40: #{tpu_custom_call.1} parent=31 // pred_fallthru
          _
        %s186 = sand.u32 %s29, 1
        %s187 = scalar_lea.sflag [#allocation3], %s186
        %s188 = sand.u32 %s29, 1
        %s189 = smul.addr %s188, 256
        %s190 = scalar_lea.vmem [#allocation2], %s189
        %p191 = pneg %p42
        %p192 = pneg %p39
        %p193 = pneg %p63
        %p194 = pneg %p60
        %p195 = pneg %p84
        %p196 = pneg %p81
        %p197 = pneg %p110
        %p198 = pneg %p107
        %s199 = sand.u32 %s97, 1
        %s200 = scalar_lea.sflag [#allocation4], %s199
        %s201 = sand.u32 %s97, 1
        %s202 = smul.addr %s201, 256
        %s203 = scalar_lea.vmem [#allocation7], %s202
        %s204 = smul.u32 32, %s21
        %s205 = smul.u32 32, %s21
        %v206 = vld [vmem:[%s177] sm:$0xff]
        %v207 = vld [vmem:[%s177 + $0x8] sm:$0xff]
        %v208 = vld [vmem:[%s177 + $0x10] sm:$0xff]
        %v209 = vld [vmem:[%s177 + $0x18] sm:$0xff]
        %v210 = vld [vmem:[%s177 + $0x20] sm:$0xff]
        %v211 = vld [vmem:[%s177 + $0x28] sm:$0xff]
        %v212 = vld [vmem:[%s177 + $0x30] sm:$0xff]
        %v213 = vld [vmem:[%s177 + $0x38] sm:$0xff]
        %v214 = vld [vmem:[%s177 + $0x40] sm:$0xff]
        %v215 = vld [vmem:[%s177 + $0x48] sm:$0xff]
        %v216 = vld [vmem:[%s177 + $0x50] sm:$0xff]
        %v217 = vld [vmem:[%s177 + $0x58] sm:$0xff]
        %v218 = vld [vmem:[%s177 + $0x60] sm:$0xff]
        %v219 = vld [vmem:[%s177 + $0x68] sm:$0xff]
        %v220 = vld [vmem:[%s177 + $0x70] sm:$0xff]
        %v221 = vld [vmem:[%s177 + $0x78] sm:$0xff]
        %v222 = vld [vmem:[%s177 + $0x80] sm:$0xff]
        %v223 = vld [vmem:[%s177 + $0x88] sm:$0xff]
        %v224 = vld [vmem:[%s177 + $0x90] sm:$0xff]
        %v225 = vld [vmem:[%s177 + $0x98] sm:$0xff]
        %v226 = vld [vmem:[%s177 + $0xa0] sm:$0xff]
        %v227 = vld [vmem:[%s177 + $0xa8] sm:$0xff]
        %v228 = vld [vmem:[%s177 + $0xb0] sm:$0xff]
        %v229 = vld [vmem:[%s177 + $0xb8] sm:$0xff]
        %v230 = vld [vmem:[%s177 + $0xc0] sm:$0xff]
        %v231 = vld [vmem:[%s177 + $0xc8] sm:$0xff]
        %v232 = vld [vmem:[%s177 + $0xd0] sm:$0xff]
        %v233 = vld [vmem:[%s177 + $0xd8] sm:$0xff]
        %v234 = vld [vmem:[%s177 + $0xe0] sm:$0xff]
        %v235 = vld [vmem:[%s177 + $0xe8] sm:$0xff]
        %v236 = vld [vmem:[%s177 + $0xf0] sm:$0xff]
        %v237 = vld [vmem:[%s177 + $0xf8] sm:$0xff]
        %v238 = vld [vmem:[#allocation5] sm:$0xff]
        %v239 = vld [vmem:[#allocation5 + $0x8] sm:$0xff]
        %v240 = vld [vmem:[#allocation5 + $0x10] sm:$0xff]
        %v241 = vld [vmem:[#allocation5 + $0x18] sm:$0xff]
        %v242 = vld [vmem:[#allocation5 + $0x20] sm:$0xff]
        %v243 = vld [vmem:[#allocation5 + $0x28] sm:$0xff]
        %v244 = vld [vmem:[#allocation5 + $0x30] sm:$0xff]
        %v245 = vld [vmem:[#allocation5 + $0x38] sm:$0xff]
        %v246 = vld [vmem:[#allocation5 + $0x40] sm:$0xff]
        %v247 = vld [vmem:[#allocation5 + $0x48] sm:$0xff]
        %v248 = vld [vmem:[#allocation5 + $0x50] sm:$0xff]
        %v249 = vld [vmem:[#allocation5 + $0x58] sm:$0xff]
        %v250 = vld [vmem:[#allocation5 + $0x60] sm:$0xff]
        %v251 = vld [vmem:[#allocation5 + $0x68] sm:$0xff]
        %v252 = vld [vmem:[#allocation5 + $0x70] sm:$0xff]
        %v253 = vld [vmem:[#allocation5 + $0x78] sm:$0xff]
        %v254 = vld [vmem:[%s2] sm:$0x1]
        %v256 = vlaneseq
        %v257 = vshrl.u32 %v256, 7
        %v258 = vsub.s32 0, %v257
        %v259 = vrot.slane %v254, %v258
        %261 = vmatprep.subr.mxu0 0.0
        %262 = vmatpush1.msra.mxu0 %v253
        %263 = vmatprep.subr.mxu0 0.0
        %264 = vmatpush1.msra.mxu0 %v252
        %265 = vmatprep.subr.mxu0 0.0
        %266 = vmatpush1.msra.mxu0 %v251
        %267 = vmatprep.subr.mxu0 0.0
        %268 = vmatpush1.msra.mxu0 %v250
        %269 = vmatprep.subr.mxu0 0.0
        %270 = vmatpush1.msra.mxu0 %v249
        %271 = vmatprep.subr.mxu0 0.0
        %272 = vmatpush1.msra.mxu0 %v248
        %273 = vmatprep.subr.mxu0 0.0
        %274 = vmatpush1.msra.mxu0 %v247
        %275 = vmatprep.subr.mxu0 0.0
        %276 = vmatpush1.msra.mxu0 %v246
        %277 = vmatprep.subr.mxu0 0.0
        %278 = vmatpush1.msra.mxu0 %v245
        %279 = vmatprep.subr.mxu0 0.0
        %280 = vmatpush1.msra.mxu0 %v244
        %281 = vmatprep.subr.mxu0 0.0
        %282 = vmatpush1.msra.mxu0 %v243
        %283 = vmatprep.subr.mxu0 0.0
        %284 = vmatpush1.msra.mxu0 %v242
        %285 = vmatprep.subr.mxu0 0.0
        %286 = vmatpush1.msra.mxu0 %v241
        %287 = vmatprep.subr.mxu0 0.0
        %288 = vmatpush1.msra.mxu0 %v240
        %289 = vmatprep.subr.mxu0 0.0
        %290 = vmatpush1.msra.mxu0 %v239
        %291 = vmatprep.subr.mxu0 0.0
        %292 = vmatpush1.msra.mxu0 %v238
        %293 = vmatprep.subr.mxu0 0.0
        %294 = vmatpush2.msra.mxu0 0.0
        %295 = vmatprep.subr.mxu0 0.0
        %296 = vmatpush2.msra.mxu0 0.0
        %297 = vmatprep.subr.mxu0 0.0
        %298 = vmatpush2.msra.mxu0 0.0
        %299 = vmatprep.subr.mxu0 0.0
        %300 = vmatpush2.msra.mxu0 0.0
        %301 = vmatprep.subr.mxu0 0.0
        %302 = vmatpush2.msra.mxu0 0.0
        %303 = vmatprep.subr.mxu0 0.0
        %304 = vmatpush2.msra.mxu0 0.0
        %305 = vmatprep.subr.mxu0 0.0
        %306 = vmatpush2.msra.mxu0 0.0
        %307 = vmatprep.subr.mxu0 0.0
        %308 = vmatpush2.msra.mxu0 0.0
        %309 = vmatprep.subr.mxu0 0.0
        %310 = vmatpush2.msra.mxu0 0.0
        %311 = vmatprep.subr.mxu0 0.0
        %312 = vmatpush2.msra.mxu0 0.0
        %313 = vmatprep.subr.mxu0 0.0
        %314 = vmatpush2.msra.mxu0 0.0
        %315 = vmatprep.subr.mxu0 0.0
        %316 = vmatpush2.msra.mxu0 0.0
        %317 = vmatprep.subr.mxu0 0.0
        %318 = vmatpush2.msra.mxu0 0.0
        %319 = vmatprep.subr.mxu0 0.0
        %320 = vmatpush2.msra.mxu0 0.0
        %321 = vmatprep.subr.mxu0 0.0
        %322 = vmatpush2.msra.mxu0 0.0
        %323 = vmatprep.subr.mxu0 0.0
        %324 = vmatpush2.msra.mxu0 0.0
        %325 = vmatprep.mubr.f32.mxu0 0.0
        %326 = vmatmul.mubr.f32.gmra.mxu0 %v206
        %v327 = vpop.f32.mrf.mxu0
        %v328 = vadd.f32 %v259, %v327
        %v329 = vpop.f32.mrf.mxu0
        %330 = vmatprep.mubr.f32.mxu0 0.0
        %331 = vmatmul.mubr.f32.gmra.mxu0 %v207
        %v332 = vpop.f32.mrf.mxu0
        %v333 = vadd.f32 %v259, %v332
        %v334 = vpop.f32.mrf.mxu0
        %335 = vmatprep.mubr.f32.mxu0 0.0
        %336 = vmatmul.mubr.f32.gmra.mxu0 %v208
        %v337 = vpop.f32.mrf.mxu0
        %v338 = vadd.f32 %v259, %v337
        %v339 = vpop.f32.mrf.mxu0
        %340 = vmatprep.mubr.f32.mxu0 0.0
        %341 = vmatmul.mubr.f32.gmra.mxu0 %v209
        %v342 = vpop.f32.mrf.mxu0
        %v343 = vadd.f32 %v259, %v342
        %v344 = vpop.f32.mrf.mxu0
        %345 = vmatprep.mubr.f32.mxu0 0.0
        %346 = vmatmul.mubr.f32.gmra.mxu0 %v210
        %v347 = vpop.f32.mrf.mxu0
        %v348 = vadd.f32 %v259, %v347
        %v349 = vpop.f32.mrf.mxu0
        %350 = vmatprep.mubr.f32.mxu0 0.0
        %351 = vmatmul.mubr.f32.gmra.mxu0 %v211
        %v352 = vpop.f32.mrf.mxu0
        %v353 = vadd.f32 %v259, %v352
        %v354 = vpop.f32.mrf.mxu0
        %355 = vmatprep.mubr.f32.mxu0 0.0
        %356 = vmatmul.mubr.f32.gmra.mxu0 %v212
        %v357 = vpop.f32.mrf.mxu0
        %v358 = vadd.f32 %v259, %v357
        %v359 = vpop.f32.mrf.mxu0
        %360 = vmatprep.mubr.f32.mxu0 0.0
        %361 = vmatmul.mubr.f32.gmra.mxu0 %v213
        %v362 = vpop.f32.mrf.mxu0
        %v363 = vadd.f32 %v259, %v362
        %v364 = vpop.f32.mrf.mxu0
        %365 = vmatprep.mubr.f32.mxu0 0.0
        %366 = vmatmul.mubr.f32.gmra.mxu0 %v214
        %v367 = vpop.f32.mrf.mxu0
        %v368 = vadd.f32 %v259, %v367
        %v369 = vpop.f32.mrf.mxu0
        %370 = vmatprep.mubr.f32.mxu0 0.0
        %371 = vmatmul.mubr.f32.gmra.mxu0 %v215
        %v372 = vpop.f32.mrf.mxu0
        %v373 = vadd.f32 %v259, %v372
        %v374 = vpop.f32.mrf.mxu0
        %375 = vmatprep.mubr.f32.mxu0 0.0
        %376 = vmatmul.mubr.f32.gmra.mxu0 %v216
        %v377 = vpop.f32.mrf.mxu0
        %v378 = vadd.f32 %v259, %v377
        %v379 = vpop.f32.mrf.mxu0
        %380 = vmatprep.mubr.f32.mxu0 0.0
        %381 = vmatmul.mubr.f32.gmra.mxu0 %v217
        %v382 = vpop.f32.mrf.mxu0
        %v383 = vadd.f32 %v259, %v382
        %v384 = vpop.f32.mrf.mxu0
        %385 = vmatprep.mubr.f32.mxu0 0.0
        %386 = vmatmul.mubr.f32.gmra.mxu0 %v218
        %v387 = vpop.f32.mrf.mxu0
        %v388 = vadd.f32 %v259, %v387
        %v389 = vpop.f32.mrf.mxu0
        %390 = vmatprep.mubr.f32.mxu0 0.0
        %391 = vmatmul.mubr.f32.gmra.mxu0 %v219
        %v392 = vpop.f32.mrf.mxu0
        %v393 = vadd.f32 %v259, %v392
        %v394 = vpop.f32.mrf.mxu0
        %395 = vmatprep.mubr.f32.mxu0 0.0
        %396 = vmatmul.mubr.f32.gmra.mxu0 %v220
        %v397 = vpop.f32.mrf.mxu0
        %v398 = vadd.f32 %v259, %v397
        %v399 = vpop.f32.mrf.mxu0
        %400 = vmatprep.mubr.f32.mxu0 0.0
        %401 = vmatmul.mubr.f32.gmra.mxu0 %v221
        %v402 = vpop.f32.mrf.mxu0
        %v403 = vadd.f32 %v259, %v402
        %v404 = vpop.f32.mrf.mxu0
        %405 = vmatprep.mubr.f32.mxu0 0.0
        %406 = vmatmul.mubr.f32.gmra.mxu0 %v222
        %v407 = vpop.f32.mrf.mxu0
        %v408 = vadd.f32 %v259, %v407
        %v409 = vpop.f32.mrf.mxu0
        %410 = vmatprep.mubr.f32.mxu0 0.0
        %411 = vmatmul.mubr.f32.gmra.mxu0 %v223
        %v412 = vpop.f32.mrf.mxu0
        %v413 = vadd.f32 %v259, %v412
        %v414 = vpop.f32.mrf.mxu0
        %415 = vmatprep.mubr.f32.mxu0 0.0
        %416 = vmatmul.mubr.f32.gmra.mxu0 %v224
        %v417 = vpop.f32.mrf.mxu0
        %v418 = vadd.f32 %v259, %v417
        %v419 = vpop.f32.mrf.mxu0
        %420 = vmatprep.mubr.f32.mxu0 0.0
        %421 = vmatmul.mubr.f32.gmra.mxu0 %v225
        %v422 = vpop.f32.mrf.mxu0
        %v423 = vadd.f32 %v259, %v422
        %v424 = vpop.f32.mrf.mxu0
        %425 = vmatprep.mubr.f32.mxu0 0.0
        %426 = vmatmul.mubr.f32.gmra.mxu0 %v226
        %v427 = vpop.f32.mrf.mxu0
        %v428 = vadd.f32 %v259, %v427
        %v429 = vpop.f32.mrf.mxu0
        %430 = vmatprep.mubr.f32.mxu0 0.0
        %431 = vmatmul.mubr.f32.gmra.mxu0 %v227
        %v432 = vpop.f32.mrf.mxu0
        %v433 = vadd.f32 %v259, %v432
        %v434 = vpop.f32.mrf.mxu0
        %435 = vmatprep.mubr.f32.mxu0 0.0
        %436 = vmatmul.mubr.f32.gmra.mxu0 %v228
        %v437 = vpop.f32.mrf.mxu0
        %v438 = vadd.f32 %v259, %v437
        %v439 = vpop.f32.mrf.mxu0
        %440 = vmatprep.mubr.f32.mxu0 0.0
        %441 = vmatmul.mubr.f32.gmra.mxu0 %v229
        %v442 = vpop.f32.mrf.mxu0
        %v443 = vadd.f32 %v259, %v442
        %v444 = vpop.f32.mrf.mxu0
        %445 = vmatprep.mubr.f32.mxu0 0.0
        %446 = vmatmul.mubr.f32.gmra.mxu0 %v230
        %v447 = vpop.f32.mrf.mxu0
        %v448 = vadd.f32 %v259, %v447
        %v449 = vpop.f32.mrf.mxu0
        %450 = vmatprep.mubr.f32.mxu0 0.0
        %451 = vmatmul.mubr.f32.gmra.mxu0 %v231
        %v452 = vpop.f32.mrf.mxu0
        %v453 = vadd.f32 %v259, %v452
        %v454 = vpop.f32.mrf.mxu0
        %455 = vmatprep.mubr.f32.mxu0 0.0
        %456 = vmatmul.mubr.f32.gmra.mxu0 %v232
        %v457 = vpop.f32.mrf.mxu0
        %v458 = vadd.f32 %v259, %v457
        %v459 = vpop.f32.mrf.mxu0
        %460 = vmatprep.mubr.f32.mxu0 0.0
        %461 = vmatmul.mubr.f32.gmra.mxu0 %v233
        %v462 = vpop.f32.mrf.mxu0
        %v463 = vadd.f32 %v259, %v462
        %v464 = vpop.f32.mrf.mxu0
        %465 = vmatprep.mubr.f32.mxu0 0.0
        %466 = vmatmul.mubr.f32.gmra.mxu0 %v234
        %v467 = vpop.f32.mrf.mxu0
        %v468 = vadd.f32 %v259, %v467
        %v469 = vpop.f32.mrf.mxu0
        %470 = vmatprep.mubr.f32.mxu0 0.0
        %471 = vmatmul.mubr.f32.gmra.mxu0 %v235
        %v472 = vpop.f32.mrf.mxu0
        %v473 = vadd.f32 %v259, %v472
        %v474 = vpop.f32.mrf.mxu0
        %475 = vmatprep.mubr.f32.mxu0 0.0
        %476 = vmatmul.mubr.f32.gmra.mxu0 %v236
        %v477 = vpop.f32.mrf.mxu0
        %v478 = vadd.f32 %v259, %v477
        %v479 = vpop.f32.mrf.mxu0
        %480 = vmatprep.mubr.f32.mxu0 0.0
        %481 = vmatmul.mubr.f32.gmra.mxu0 %v237
        %v482 = vpop.f32.mrf.mxu0
        %v483 = vadd.f32 %v259, %v482
        %v484 = vpop.f32.mrf.mxu0
        %485 = vdwg.mxu0
        %v486 = vmax.f32 %v328, 0.0
        %v487 = vmax.f32 %v333, 0.0
        %v488 = vmax.f32 %v338, 0.0
        %v489 = vmax.f32 %v343, 0.0
        %v490 = vmax.f32 %v348, 0.0
        %v491 = vmax.f32 %v353, 0.0
        %v492 = vmax.f32 %v358, 0.0
        %v493 = vmax.f32 %v363, 0.0
        %v494 = vmax.f32 %v368, 0.0
        %v495 = vmax.f32 %v373, 0.0
        %v496 = vmax.f32 %v378, 0.0
        %v497 = vmax.f32 %v383, 0.0
        %v498 = vmax.f32 %v388, 0.0
        %v499 = vmax.f32 %v393, 0.0
        %v500 = vmax.f32 %v398, 0.0
        %v501 = vmax.f32 %v403, 0.0
        %v502 = vmax.f32 %v408, 0.0
        %v503 = vmax.f32 %v413, 0.0
        %v504 = vmax.f32 %v418, 0.0
        %v505 = vmax.f32 %v423, 0.0
        %v506 = vmax.f32 %v428, 0.0
        %v507 = vmax.f32 %v433, 0.0
        %v508 = vmax.f32 %v438, 0.0
        %v509 = vmax.f32 %v443, 0.0
        %v510 = vmax.f32 %v448, 0.0
        %v511 = vmax.f32 %v453, 0.0
        %v512 = vmax.f32 %v458, 0.0
        %v513 = vmax.f32 %v463, 0.0
        %v514 = vmax.f32 %v468, 0.0
        %v515 = vmax.f32 %v473, 0.0
        %v516 = vmax.f32 %v478, 0.0
        %v517 = vmax.f32 %v483, 0.0
        %518 = vst [vmem:[%s203] sm:$0xff] %v486
        %519 = vst [vmem:[%s203 + $0x8] sm:$0xff] %v487
        %520 = vst [vmem:[%s203 + $0x10] sm:$0xff] %v488
        %521 = vst [vmem:[%s203 + $0x18] sm:$0xff] %v489
        %522 = vst [vmem:[%s203 + $0x20] sm:$0xff] %v490
        %523 = vst [vmem:[%s203 + $0x28] sm:$0xff] %v491
        %524 = vst [vmem:[%s203 + $0x30] sm:$0xff] %v492
        %525 = vst [vmem:[%s203 + $0x38] sm:$0xff] %v493
        %526 = vst [vmem:[%s203 + $0x40] sm:$0xff] %v494
        %527 = vst [vmem:[%s203 + $0x48] sm:$0xff] %v495
        %528 = vst [vmem:[%s203 + $0x50] sm:$0xff] %v496
        %529 = vst [vmem:[%s203 + $0x58] sm:$0xff] %v497
        %530 = vst [vmem:[%s203 + $0x60] sm:$0xff] %v498
        %531 = vst [vmem:[%s203 + $0x68] sm:$0xff] %v499
        %532 = vst [vmem:[%s203 + $0x70] sm:$0xff] %v500
        %533 = vst [vmem:[%s203 + $0x78] sm:$0xff] %v501
        %534 = vst [vmem:[%s203 + $0x80] sm:$0xff] %v502
        %535 = vst [vmem:[%s203 + $0x88] sm:$0xff] %v503
        %536 = vst [vmem:[%s203 + $0x90] sm:$0xff] %v504
        %537 = vst [vmem:[%s203 + $0x98] sm:$0xff] %v505
        %538 = vst [vmem:[%s203 + $0xa0] sm:$0xff] %v506
        %539 = vst [vmem:[%s203 + $0xa8] sm:$0xff] %v507
        %540 = vst [vmem:[%s203 + $0xb0] sm:$0xff] %v508
        %541 = vst [vmem:[%s203 + $0xb8] sm:$0xff] %v509
        %542 = vst [vmem:[%s203 + $0xc0] sm:$0xff] %v510
        %543 = vst [vmem:[%s203 + $0xc8] sm:$0xff] %v511
        %544 = vst [vmem:[%s203 + $0xd0] sm:$0xff] %v512
        %545 = vst [vmem:[%s203 + $0xd8] sm:$0xff] %v513
        %546 = vst [vmem:[%s203 + $0xe0] sm:$0xff] %v514
        %547 = vst [vmem:[%s203 + $0xe8] sm:$0xff] %v515
        %548 = vst [vmem:[%s203 + $0xf0] sm:$0xff] %v516
        %549 = vst [vmem:[%s203 + $0xf8] sm:$0xff] %v517
        %s550 = sand.u32 %s97, 1
        %s551 = scalar_lea.sflag [#allocation4], %s550
        %s552 = sand.u32 %s97, 1
        %s553 = smul.addr %s552, 256
        %s554 = scalar_lea.vmem [#allocation7], %s553
        // Predicated region
        $region41: #{tpu_custom_call.1} parent=31 // pred_check
          %p555 = pneg %p107
        $region42: #{tpu_custom_call.1} parent=31 // pred_check_branch
          %557 = sbr.rel (%p555) target = $region44
        $region43: #{tpu_custom_call.1} parent=31 // pred_region
          %s558 = smul.u32 32, %s21
          %s560 = ssub.s32 4096, 4096
          %561 = vsyncadd %s551, %s560
          %s562 = smul.addr %s558, 128
          %s563 = scalar_lea.hbm %s3, %s562
          %s564 = sshll.u32 %s554, 4
          %s565 = int_to_ptr.vmem [resolvable:$true] %s564
          %570 = dma.vmem_to_hbm [thread:$0]  %s565, 4096, %s563, %s551, 128, 128, 8
        $region44: #{tpu_custom_call.1} parent=31 // pred_fallthru
          _
      $region32: #{tpu_custom_call.1} parent=5 // pred_fallthru
        _
      %p571 = scmp.le.s32.totalorder 2, %s16
      // Predicated region
      $region45: #{tpu_custom_call.1} parent=5 // pred_check
        %p572 = pneg %p571
      $region46: #{tpu_custom_call.1} parent=5 // pred_check_branch
        %574 = sbr.rel (%p572) target = $region48
      $region47: #{tpu_custom_call.1} parent=5 // pred_region
        %s575 = ssub.s32 %s16, 2
        // Predicated region
        $region49: #{tpu_custom_call.1} parent=47 // pred_check
          %p576 = pneg %p113
        $region50: #{tpu_custom_call.1} parent=47 // pred_check_branch
          %578 = sbr.rel (%p576) target = $region52
        $region51: #{tpu_custom_call.1} parent=47 // pred_region
          %s579 = sand.u32 %s98, 1
          %s580 = scalar_lea.sflag [#allocation4], %s579
          %s581 = sand.u32 %s98, 1
          %s582 = smul.addr %s581, 256
          %s583 = scalar_lea.vmem [#allocation7], %s582
          %584 = dma.done %s580, 4096
        $region52: #{tpu_custom_call.1} parent=47 // pred_fallthru
          _
      $region48: #{tpu_custom_call.1} parent=5 // pred_fallthru
        _
    $region6: #{tpu_custom_call.1} parent=1 // loop_footer
      %s20 = sadd.s32 1, %s16
    $region7: #{tpu_custom_call.1} parent=1 // loop_footer_branch
      %15 = sbr.rel target = $region3
    $region8: #{tpu_custom_call.1} parent=1 // loop_exit
      _
    %585 = vsyncpa [#allocation3], 1
    %s586 = scalar_lea.sflag [#allocation3], 1
    %587 = vsyncpa %s586, 1
    %588 = vsyncpa [#allocation6], 1
    %589 = vsyncpa [#allocation4], 1
    %s590 = scalar_lea.sflag [#allocation4], 1
    %591 = vsyncpa %s590, 1

</llo_original>
